<compile_context>
chip_gen: v7x
topology: tpu7x:2x2x1
jax: 0.10.0
libtpu: 0.0.40
codegen_flags: <defaults>
</compile_context>

<pallas_src>
import functools

import numpy as np
import jax
import jax.numpy as jnp
from jax.experimental import pallas as pl
from jax.experimental.pallas import tpu as pltpu

_LANES = 128
_MAX_TILE = 1024  # lanes of flattened N*C processed per grid step


# ------------------------------- kernel --------------------------------------
def _tv_kernel(inv_count, x_ref, o_ref):
    # x_ref: (H, W, TILE) f32 block; lanes = flattened batch*channel.
    # o_ref: (1, 1) f32 in SMEM, resident across the whole grid (accumulator).
    step = pl.program_id(0)

    @pl.when(step == 0)
    def _init():
        o_ref[0, 0] = jnp.float32(0.0)

    x = x_ref[...]
    dh = x[:-1, :, :] - x[1:, :, :]        # (H-1, W,   TILE)
    dw = x[:, :-1, :] - x[:, 1:, :]        # (H,   W-1, TILE)
    s = dh * dh + dw * dw                  # same broadcast rule as the torch op
    t = s * jnp.sqrt(jnp.sqrt(s))          # s ** 1.25
    o_ref[0, 0] += jnp.sum(t)              # f32 accumulation

    @pl.when(step == pl.num_programs(0) - 1)
    def _finalize():
        o_ref[0, 0] *= inv_count


# ------------------------------- wrapper --------------------------------------
def total_variation(x_nchw):
    """Pallas TPU implementation of TotalVariation.forward (NCHW input)."""
    N, C, H, W = x_nchw.shape

    # Reproduce the reference broadcast of (H-1, W) with (H, W-1); raises for
    # the same shapes the PyTorch module raises on.
    Hb, Wb = np.broadcast_shapes((H - 1, W), (H, W - 1))
    inv_count = 1.0 / float(N * C * Hb * Wb)

    # Lane-dense layout: (N, C, H, W) -> (H, W, N*C); pad N*C to a lane-tile
    # multiple with zeros (zero lanes contribute exactly 0 to the sum).
    NC = N * C
    x = jnp.transpose(x_nchw.astype(jnp.float32), (2, 3, 0, 1)).reshape(H, W, NC)
    tile = min(_MAX_TILE, pl.cdiv(NC, _LANES) * _LANES)
    NCp = pl.cdiv(NC, tile) * tile
    if NCp != NC:
        x = jnp.pad(x, ((0, 0), (0, 0), (0, NCp - NC)))

    out = pl.pallas_call(
        functools.partial(_tv_kernel, inv_count),
        out_shape=jax.ShapeDtypeStruct((1, 1), jnp.float32),
        grid=(NCp // tile,),
        in_specs=[pl.BlockSpec((H, W, tile), lambda i: (0, 0, i))],
        out_specs=pl.BlockSpec(memory_space=pltpu.MemorySpace.SMEM),
        compiler_params=pltpu.CompilerParams(
            dimension_semantics=("arbitrary",)),
    )(x)
    return out[0, 0]


# ------------------------------ reference -------------------------------------
def _tv_ref(x_nchw):
    x = x_nchw.astype(jnp.float32)
    dh = x[:, :, :-1, :] - x[:, :, 1:, :]
    dw = x[:, :, :, :-1] - x[:, :, :, 1:]
    s = dh * dh + dw * dw
    return jnp.mean(s ** 1.25)


# --------------------------------- main ----------------------------------------
if __name__ == "__main__":
    key = jax.random.PRNGKey(0)
    # NCHW input.  H = W = 2 is the only spatial size where the reference
    # module's implicit broadcast of (H-1, W) with (H, W-1) is defined.
    x = jax.random.uniform(key, (2, 4, 2, 2), dtype=jnp.float32)

    tv = jax.jit(total_variation)(x)
    jax.block_until_ready(tv)

    ref = _tv_ref(x)
    np.testing.assert_allclose(np.asarray(tv), np.asarray(ref),
                               rtol=1e-4, atol=1e-6)
    print("KERNEL_OK")
</pallas_src>

<mosaic_0001>
module attributes {stable_mosaic.version = 11 : i64} {
  func.func @_tv_kernel(%arg0: i32, %arg1: memref<2x2x128xf32, #tpu.memory_space<vmem>>, %arg2: memref<1x1xf32, #tpu.memory_space<smem>>) attributes {dimension_semantics = [#tpu.dimension_semantics<arbitrary>], iteration_bounds = array<i64: 1>, scalar_prefetch = 0 : i64, scratch_operands = 0 : i64, tpu.core_type = #tpu.core_type<tc>, window_params = [{transform_indices = @transform_0, window_bounds = array<i64: 2, 2, 128>}, {transform_indices = @transform_1, window_bounds = array<i64: 1, 1>}]} {
    %c0_i32 = arith.constant 0 : i32
    %0 = arith.cmpi eq, %arg0, %c0_i32 : i32
    %1 = arith.extui %0 : i1 to i32
    %c0_i32_0 = arith.constant 0 : i32
    %2 = arith.cmpi ne, %1, %c0_i32_0 : i32
    scf.if %2 {
      %cst_9 = arith.constant 0.000000e+00 : f32
      %c0_10 = arith.constant 0 : index
      %c0_11 = arith.constant 0 : index
      %28 = memref.load %arg2[%c0_10, %c0_11] : memref<1x1xf32, #tpu.memory_space<smem>>
      memref.store %cst_9, %arg2[%c0_10, %c0_11] : memref<1x1xf32, #tpu.memory_space<smem>>
    } else {
    }
    %c0 = arith.constant 0 : index
    %c0_1 = arith.constant 0 : index
    %c0_2 = arith.constant 0 : index
    %3 = vector.load %arg1[%c0, %c0_1, %c0_2] : memref<2x2x128xf32, #tpu.memory_space<vmem>>, vector<2x2x128xf32>
    %4 = vector.extract_strided_slice %3 {offsets = [0, 0, 0], sizes = [1, 2, 128], strides = [1, 1, 1]} : vector<2x2x128xf32> to vector<1x2x128xf32>
    %5 = vector.extract_strided_slice %3 {offsets = [1, 0, 0], sizes = [1, 2, 128], strides = [1, 1, 1]} : vector<2x2x128xf32> to vector<1x2x128xf32>
    %6 = arith.subf %4, %5 : vector<1x2x128xf32>
    %7 = vector.extract_strided_slice %3 {offsets = [0, 0, 0], sizes = [2, 1, 128], strides = [1, 1, 1]} : vector<2x2x128xf32> to vector<2x1x128xf32>
    %8 = vector.extract_strided_slice %3 {offsets = [0, 1, 0], sizes = [2, 1, 128], strides = [1, 1, 1]} : vector<2x2x128xf32> to vector<2x1x128xf32>
    %9 = arith.subf %7, %8 : vector<2x1x128xf32>
    %10 = arith.mulf %6, %6 : vector<1x2x128xf32>
    %11 = arith.mulf %9, %9 : vector<2x1x128xf32>
    %12 = vector.broadcast %10 : vector<1x2x128xf32> to vector<2x2x128xf32>
    %13 = vector.broadcast %11 : vector<2x1x128xf32> to vector<2x2x128xf32>
    %14 = arith.addf %12, %13 : vector<2x2x128xf32>
    %15 = math.sqrt %14 : vector<2x2x128xf32>
    %16 = math.sqrt %15 : vector<2x2x128xf32>
    %17 = arith.mulf %14, %16 : vector<2x2x128xf32>
    %c0_3 = arith.constant 0 : index
    %c0_4 = arith.constant 0 : index
    %18 = memref.load %arg2[%c0_3, %c0_4] : memref<1x1xf32, #tpu.memory_space<smem>>
    %19 = vector.shape_cast %17 : vector<2x2x128xf32> to vector<1x2x2x128xf32>
    %cst = arith.constant dense<0.000000e+00> : vector<1xf32>
    %20 = vector.multi_reduction <add>, %19, %cst [1, 2, 3] : vector<1x2x2x128xf32> to vector<1xf32>
    %21 = vector.shape_cast %20 : vector<1xf32> to vector<1x1x1x1xf32>
    %22 = vector.extract %21[0, 0, 0, 0] : f32 from vector<1x1x1x1xf32>
    %23 = arith.addf %18, %22 : f32
    %c0_5 = arith.constant 0 : index
    %c0_6 = arith.constant 0 : index
    %24 = memref.load %arg2[%c0_5, %c0_6] : memref<1x1xf32, #tpu.memory_space<smem>>
    memref.store %23, %arg2[%c0_5, %c0_6] : memref<1x1xf32, #tpu.memory_space<smem>>
    %c0_i32_7 = arith.constant 0 : i32
    %25 = arith.cmpi eq, %arg0, %c0_i32_7 : i32
    %26 = arith.extui %25 : i1 to i32
    %c0_i32_8 = arith.constant 0 : i32
    %27 = arith.cmpi ne, %26, %c0_i32_8 : i32
    scf.if %27 {
      %c0_9 = arith.constant 0 : index
      %c0_10 = arith.constant 0 : index
      %28 = memref.load %arg2[%c0_9, %c0_10] : memref<1x1xf32, #tpu.memory_space<smem>>
      %cst_11 = arith.constant 3.125000e-02 : f32
      %29 = arith.mulf %28, %cst_11 : f32
      %c0_12 = arith.constant 0 : index
      %c0_13 = arith.constant 0 : index
      %30 = memref.load %arg2[%c0_12, %c0_13] : memref<1x1xf32, #tpu.memory_space<smem>>
      memref.store %29, %arg2[%c0_12, %c0_13] : memref<1x1xf32, #tpu.memory_space<smem>>
    } else {
    }
    return
  }
  func.func @transform_0(%arg0: i32) -> (i32, i32, i32) {
    %c0_i32 = arith.constant 0 : i32
    %c0_i32_0 = arith.constant 0 : i32
    %c0_i32_1 = arith.constant 0 : i32
    return %c0_i32, %c0_i32_0, %arg0 : i32, i32, i32
  }
  func.func @transform_1(%arg0: i32) -> (i32, i32) {
    %c0_i32 = arith.constant 0 : i32
    %c0_i32_0 = arith.constant 0 : i32
    %c0_i32_1 = arith.constant 0 : i32
    return %c0_i32, %c0_i32_0 : i32, i32
  }
}

</mosaic_0001>

<llo_original>
// kernel: total_variation.1
$region0: #{total_variation.1}
  #allocation0 [shape = 'u32[]', space=smem, size = 0x4, offset = 0x4, fixed_abs, tag = 'smem constant byte address 0x4 - core index']
  #allocation1 [shape = 'u32[144,128]{1,0:T(1,128)}', space=vmem, size = 0x12000, scoped, tag = 'internal scratch']
  %s0 = inlined_call_operand.vmem [shape: f32[2,2,128], index: 0, kind: input, shape index: {}]
  %s1 = inlined_call_operand.hbm [shape: f32[1,1], index: 1, kind: output, shape index: {}]
  %s2 = sld [smem:[#allocation0]]
  $region22: #{total_variation.1} parent=0
    _
  %s4 = ssub.s32 1, %s2
  %s5 = scalar_select 0, %s4, %s2
  $region1: #{total_variation.1} parent=0
    #allocation2 [shape = 'u8[512]{0}', space=smem, size = 0x200, scoped, tag = 'output window, operand 0, single buffered']
    #allocation3 [shape = 's32[1]{0}', space=sflag, size = 0x4, scoped, tag = 'scoped memory for total_variation.1']
    %6 = vsyncpa [#allocation3], 0
    // Predicated region
    $region2: #{total_variation.1} parent=1 // pred_check
      _
    $region3: #{total_variation.1} parent=1 // pred_check_branch
      %8 = sbr.rel (0) target = $region5
    $region4: #{total_variation.1} parent=1 // pred_region
      _
    $region5: #{total_variation.1} parent=1 // pred_fallthru
      _
    %p9 = scmp.eq.s32.totalorder 0, 0
    // Predicated region
    $region6: #{total_variation.1} parent=1 // pred_check
      %p10 = pneg %p9
    $region7: #{total_variation.1} parent=1 // pred_check_branch
      %12 = sbr.rel (%p10) target = $region9
    $region8: #{total_variation.1} parent=1 // pred_region
      %s13 = scalar_lea.smem [#allocation2], 0
      %14 = sst [smem:[%s13]] 0.0
    $region9: #{total_variation.1} parent=1 // pred_fallthru
      _
    %v15 = vld [vmem:[%s0] sm:$0x3]
    %v16 = vld [vmem:[%s0 + $0x2] sm:$0x3]
    %v17 = vsub.f32 %v15, %v16
    %v20 = vrot.slane %v15, 1
    %v21 = vrot.slane %v16, 1
    %v24 = vsub.f32 %v15, %v20
    %v25 = vsub.f32 %v16, %v21
    %v26 = vmul.f32 %v17, %v17
    %v27 = vmul.f32 %v24, %v24
    %v28 = vmul.f32 %v25, %v25
    %v29 = vlaneseq
    %v30 = vshrl.u32 %v29, 7
    %v31 = vsub.s32 0, %v30
    %v32 = vrot.slane %v27, %v31
    %v33 = vlaneseq
    %v34 = vshrl.u32 %v33, 7
    %v35 = vsub.s32 0, %v34
    %v36 = vrot.slane %v28, %v35
    %v37 = vadd.f32 %v26, %v32
    %v38 = vadd.f32 %v26, %v36
    %v39 = vrsqrt.pop %v37
    %v40 = vmul.f32 %v37, %v39
    %vm41 = vcmp.eq.f32.partialorder %v37, inf
    %v42 = vsel %vm41, %v37, %v40
    %vm43 = vcmp.eq.f32.partialorder %v37, 0.0
    %v44 = vand.u32 %v37, 2147483648
    %v45 = vsel %vm43, %v44, %v42
    %v46 = vrsqrt.pop %v38
    %v47 = vmul.f32 %v38, %v46
    %vm48 = vcmp.eq.f32.partialorder %v38, inf
    %v49 = vsel %vm48, %v38, %v47
    %vm50 = vcmp.eq.f32.partialorder %v38, 0.0
    %v51 = vand.u32 %v38, 2147483648
    %v52 = vsel %vm50, %v51, %v49
    %v53 = vrsqrt.pop %v45
    %v54 = vmul.f32 %v45, %v53
    %vm55 = vcmp.eq.f32.partialorder %v45, inf
    %v56 = vsel %vm55, %v45, %v54
    %vm57 = vcmp.eq.f32.partialorder %v45, 0.0
    %v58 = vand.u32 %v45, 2147483648
    %v59 = vsel %vm57, %v58, %v56
    %v60 = vrsqrt.pop %v52
    %v61 = vmul.f32 %v52, %v60
    %vm62 = vcmp.eq.f32.partialorder %v52, inf
    %v63 = vsel %vm62, %v52, %v61
    %vm64 = vcmp.eq.f32.partialorder %v52, 0.0
    %v65 = vand.u32 %v52, 2147483648
    %v66 = vsel %vm64, %v65, %v63
    %v67 = vmul.f32 %v37, %v59
    %v68 = vmul.f32 %v38, %v66
    %s69 = sld [smem:[#allocation2]]
    %vm70 = vcmask 1041408
    %v71 = vsel %vm70, %v67, 0.0
    %v72 = vsel %vm70, %v68, 0.0
    %v73 = vadd.f32 %v71, %v72
    %74 = vadd.xlane.f32.xlu0 %v73
    %v75 = vpop.xlane.xlu0 %74
    %v76 = vrot.slane %v75, 4
    %v77 = vadd.f32 %v75, %v76
    %v78 = vrot.slane %v77, 2
    %v79 = vadd.f32 %v77, %v78
    %v80 = vrot.slane %v79, 1
    %v81 = vadd.f32 %v79, %v80
    %s82 = vtos %v81
    %s83 = sadd.f32 %s69, %s82
    %s84 = scalar_lea.smem [#allocation2], 0
    %85 = sst [smem:[%s84]] %s83
    // Predicated region
    $region10: #{total_variation.1} parent=1 // pred_check
      %p86 = pneg %p9
    $region11: #{total_variation.1} parent=1 // pred_check_branch
      %88 = sbr.rel (%p86) target = $region13
    $region12: #{total_variation.1} parent=1 // pred_region
      %s89 = sld [smem:[#allocation2]]
      %s90 = smul.f32 %s89, 0.03125
      %91 = sst [smem:[%s84]] %s90
    $region13: #{total_variation.1} parent=1 // pred_fallthru
      _
    // Predicated region
    $region14: #{total_variation.1} parent=1 // pred_check
      _
    $region15: #{total_variation.1} parent=1 // pred_check_branch
      %93 = sbr.rel (0) target = $region17
    $region16: #{total_variation.1} parent=1 // pred_region
      %s95 = ssub.s32 16, 16
      %96 = vsyncadd [#allocation3], %s95
      %99 = dma.smem_to_hbm [#allocation2], 16, %s1, [#allocation3]
    $region17: #{total_variation.1} parent=1 // pred_fallthru
      _
    // Predicated region
    $region18: #{total_variation.1} parent=1 // pred_check
      _
    $region19: #{total_variation.1} parent=1 // pred_check_branch
      %101 = sbr.rel (0) target = $region21
    $region20: #{total_variation.1} parent=1 // pred_region
      %102 = dma.done [#allocation3], 16
    $region21: #{total_variation.1} parent=1 // pred_fallthru
      _
    %103 = sfence
    %104 = vsyncpa [#allocation3], 1

</llo_original>
